<compile_context>
chip_gen: v5e
topology: v5e:2x2
jax: 0.10.0
libtpu: 0.0.40
codegen_flags: <defaults>
</compile_context>

<pallas_src>
import functools

import jax
import jax.numpy as jnp
from jax.experimental import pallas as pl
from jax.experimental.pallas import tpu as pltpu

LANE = 128


def _round_up(x, m):
    return ((x + m - 1) // m) * m


def _sublane(dtype):
    # 8 rows/vreg for 32-bit, 16 for 16-bit (sublane packing).
    return 16 if jnp.dtype(dtype).itemsize == 2 else 8


# --------------------------------------------------------------------------- #
# Kernel
# --------------------------------------------------------------------------- #
def _gaussian_policy_kernel(n_hidden, bias_segs, x_ref, *refs):
    """refs = [w_0 .. w_{n-1}, w_mean, packed_bias_row, mean_out].

    bias_segs: tuple of (lane_offset, padded_width) for each hidden bias and
               (last entry) the mean bias.  All offsets/widths 128-aligned.
    """
    w_refs = refs[:n_hidden]
    w_mean_ref = refs[n_hidden]
    bias_ref = refs[n_hidden + 1]
    mean_ref = refs[n_hidden + 2]

    h = x_ref[...]
    for layer in range(n_hidden):
        w = w_refs[layer][...]
        off, width = bias_segs[layer]
        b = bias_ref[:, off:off + width].astype(jnp.float32)
        # Native-dtype operands straight to the MXU; accumulate in f32.
        z = jnp.dot(h, w, preferred_element_type=jnp.float32) + b
        # Bias-add / tanh in f32, cast back to the weight dtype for the next dot.
        h = jnp.tanh(z).astype(w.dtype)

    off_m, width_m = bias_segs[n_hidden]
    b_mean = bias_ref[:, off_m:off_m + width_m].astype(jnp.float32)
    mean = jnp.dot(h, w_mean_ref[...], preferred_element_type=jnp.float32) + b_mean
    mean_ref[...] = mean.astype(mean_ref.dtype)


# --------------------------------------------------------------------------- #
# One-time parameter preparation (pad + pack; do NOT redo per call)
# --------------------------------------------------------------------------- #
def prepare_params(params, compute_dtype=None):
    """Pads every layer width to a multiple of 128 and packs all small bias
    rows into one lane-dense row.  Call once; reuse the result per forward."""
    hidden = params["hidden"]
    w_mean, b_mean = params["mean"]
    log_std = params["log_std"].reshape(1, -1)

    if compute_dtype is None:
        compute_dtype = w_mean.dtype
    compute_dtype = jnp.dtype(compute_dtype)

    in_dim = hidden[0][0].shape[0] if hidden else w_mean.shape[0]
    out_dim = w_mean.shape[1]

    ws_p, bs_p = [], []
    prev = in_dim  # first contraction dim stays un-padded (full-extent block)
    for (w, b) in hidden:
        size = w.shape[1]
        psize = _round_up(size, LANE)
        w_p = jnp.zeros((prev, psize), compute_dtype)
        w_p = w_p.at[: w.shape[0], :size].set(w.astype(compute_dtype))
        b_p = jnp.zeros((1, psize), jnp.float32).at[0, :size].set(b.astype(jnp.float32))
        ws_p.append(w_p)
        bs_p.append(b_p)
        prev = psize
    p_out = _round_up(out_dim, LANE)
    w_mean_p = jnp.zeros((prev, p_out), compute_dtype)
    w_mean_p = w_mean_p.at[: w_mean.shape[0], :out_dim].set(w_mean.astype(compute_dtype))
    b_mean_p = jnp.zeros((1, p_out), jnp.float32).at[0, :out_dim].set(b_mean.astype(jnp.float32))

    # Pack all tiny per-layer rows into ONE lane-dense f32 row -> one DMA.
    bias_segs, bias_rows, off = [], [], 0
    for row in bs_p + [b_mean_p]:
        width = row.shape[1]
        bias_segs.append((off, width))
        bias_rows.append(row)
        off += width
    bias_row = jnp.concatenate(bias_rows, axis=1)  # (1, n_rows * 128k)

    return {
        "ws": tuple(ws_p),
        "w_mean": w_mean_p,
        "bias_row": bias_row,
        "bias_segs": tuple(bias_segs),
        "log_std": log_std,
        "in_dim": in_dim,
        "out_dim": out_dim,
        "p_out": p_out,
        "dtype": compute_dtype,
        "n_hidden": len(hidden),
    }


# --------------------------------------------------------------------------- #
# Forward
# --------------------------------------------------------------------------- #
def gaussian_policy_forward(state, prepared, *, tile_b_max=4096, prefer_grid_steps=1,
                            single_buffer_constants=False, interpret=False):
    """state: (batch, input_dim); prepared: output of prepare_params.
    Returns (mean (batch, out_dim), std (1, out_dim))."""
    dtype = prepared["dtype"]
    in_dim = prepared["in_dim"]
    out_dim = prepared["out_dim"]
    p_out = prepared["p_out"]
    n_hidden = prepared["n_hidden"]
    ws_p = prepared["ws"]
    w_mean_p = prepared["w_mean"]
    bias_row = prepared["bias_row"]
    bias_segs = prepared["bias_segs"]

    batch = state.shape[0]
    assert state.shape[1] == in_dim
    if state.dtype != dtype:
        state = state.astype(dtype)

    # ---- batch tiling ---------------------------------------------------- #
    sub = _sublane(dtype)
    tile_b = min(_round_up(batch, sub), _round_up(tile_b_max, sub))
    if prefer_grid_steps > 1 and batch > sub:
        # e.g. prefer_grid_steps=2 on v7x: keep >=2 grid steps so the parallel
        # batch axis shards across both TensorCores.
        cap = _round_up(-(-batch // prefer_grid_steps), sub)
        tile_b = min(tile_b, max(cap, sub))
    batch_p = _round_up(batch, tile_b)
    grid_b = batch_p // tile_b

    # Only materialize the padded input when actually needed (tail pad only).
    if batch_p != batch:
        state = jnp.pad(state, ((0, batch_p - batch), (0, 0)))

    inputs = [state] + list(ws_p) + [w_mean_p, bias_row]

    def const_spec(a):
        # Whole-array, grid-invariant block -> stays VMEM-resident across steps.
        kwargs = {}
        if single_buffer_constants:
            # Constant-index blocks don't need double buffers (v7x VMEM budget).
            kwargs["pipeline_mode"] = pl.Buffered(1)
        return pl.BlockSpec(a.shape, lambda i, _nd=a.ndim: (0,) * _nd, **kwargs)

    in_specs = (
        [pl.BlockSpec((tile_b, in_dim), lambda i: (i, 0))]
        + [const_spec(a) for a in ws_p]
        + [const_spec(w_mean_p), const_spec(bias_row)]
    )
    out_shape = jax.ShapeDtypeStruct((batch_p, p_out), dtype)
    out_specs = pl.BlockSpec((tile_b, p_out), lambda i: (i, 0))

    # ---- VMEM budget / cost hint ------------------------------------------ #
    itemsize = jnp.dtype(dtype).itemsize
    const_bytes = (sum(int(w.size) for w in ws_p) + int(w_mean_p.size)) * itemsize \
        + int(bias_row.size) * 4
    tile_bytes = tile_b * (in_dim + p_out) * itemsize
    vmem_limit = int(min(max(2 * const_bytes + 3 * tile_bytes + (4 << 20), 16 << 20),
                         100 << 20))

    flops = 2 * batch_p * (sum(w.shape[0] * w.shape[1] for w in ws_p)
                           + w_mean_p.shape[0] * w_mean_p.shape[1])
    transcendentals = batch_p * sum(int(w.shape[1]) for w in ws_p)
    bytes_accessed = batch_p * in_dim * itemsize + const_bytes + batch_p * p_out * itemsize

    kernel = functools.partial(_gaussian_policy_kernel, n_hidden, bias_segs)
    mean_p = pl.pallas_call(
        kernel,
        grid=(grid_b,),
        in_specs=in_specs,
        out_specs=out_specs,
        out_shape=out_shape,
        compiler_params=pltpu.CompilerParams(
            dimension_semantics=("parallel",),
            vmem_limit_bytes=vmem_limit,
        ),
        cost_estimate=pl.CostEstimate(
            flops=int(flops),
            transcendentals=int(transcendentals),
            bytes_accessed=int(bytes_accessed),
        ),
        interpret=interpret,
    )(*inputs)

    mean = mean_p
    if batch_p != batch or p_out != out_dim:
        mean = mean_p[:batch, :out_dim]

    # std is batch-independent and tiny -> plain XLA in the wrapper (no kernel
    # output pipeline, no per-step redundant stores).
    std = jnp.exp(prepared["log_std"].astype(jnp.float32))
    return mean, std


# --------------------------------------------------------------------------- #
# PyTorch-style init + pure-JAX reference
# --------------------------------------------------------------------------- #
def init_params(key, input_dim, hidden_layer_sizes, output_dim, dtype=jnp.float32):
    """PyTorch-style init: U(-1/sqrt(fan_in), 1/sqrt(fan_in)).
    Weights stored as (in, out) (already transposed for x @ W)."""
    params = {"hidden": []}
    fan_in = input_dim
    for size in hidden_layer_sizes:
        key, kw, kb = jax.random.split(key, 3)
        bound = 1.0 / jnp.sqrt(fan_in)
        w = jax.random.uniform(kw, (fan_in, size), dtype, -bound, bound)
        b = jax.random.uniform(kb, (size,), dtype, -bound, bound)
        params["hidden"].append((w, b))
        fan_in = size
    key, kw, kb = jax.random.split(key, 3)
    bound = 1.0 / jnp.sqrt(fan_in)
    w_mean = jax.random.uniform(kw, (fan_in, output_dim), dtype, -bound, bound)
    b_mean = jax.random.uniform(kb, (output_dim,), dtype, -bound, bound)
    params["mean"] = (w_mean, b_mean)
    params["log_std"] = jnp.zeros((1, output_dim), dtype)  # nn.Parameter(torch.zeros)
    return params


def reference_forward(state, params):
    h = state.astype(jnp.float32)
    for w, b in params["hidden"]:
        h = jnp.tanh(h @ w.astype(jnp.float32) + b.astype(jnp.float32))
    w_mean, b_mean = params["mean"]
    mean = h @ w_mean.astype(jnp.float32) + b_mean.astype(jnp.float32)
    std = jnp.exp(params["log_std"].astype(jnp.float32))
    return mean, std


if __name__ == "__main__":
    input_dim = 16
    hidden_layer_sizes = (32, 32)
    output_dim = 8
    batch = 20  # not a multiple of the tile -> exercises batch padding/slicing

    key = jax.random.PRNGKey(0)
    key, k_state = jax.random.split(key)
    state = jax.random.normal(k_state, (batch, input_dim), jnp.float32)
    params = init_params(key, input_dim, hidden_layer_sizes, output_dim)

    mean_ref, std_ref = reference_forward(state, params)

    # ---- f32 path, multi-step grid (exercises batch-tiled "parallel" axis) --
    prepared_f32 = prepare_params(params)
    mean, std = gaussian_policy_forward(state, prepared_f32, tile_b_max=8)
    jax.block_until_ready((mean, std))
    assert mean.shape == (batch, output_dim) and std.shape == (1, output_dim)
    assert jnp.allclose(mean, mean_ref, atol=2e-2, rtol=2e-2), "mean mismatch (f32, tiled)"
    assert jnp.allclose(std, std_ref, atol=1e-6, rtol=1e-6), "std mismatch"

    # ---- f32 path, single large tile (default tiling) -----------------------
    mean2, std2 = gaussian_policy_forward(state, prepared_f32)
    jax.block_until_ready((mean2, std2))
    assert jnp.allclose(mean2, mean_ref, atol=2e-2, rtol=2e-2), "mean mismatch (f32)"
    assert jnp.allclose(std2, std_ref, atol=1e-6, rtol=1e-6)

    # ---- bf16 operand path (halved HBM traffic, f32 accumulation) -----------
    prepared_bf16 = prepare_params(params, compute_dtype=jnp.bfloat16)
    mean3, std3 = gaussian_policy_forward(state, prepared_bf16, prefer_grid_steps=2)
    jax.block_until_ready((mean3, std3))
    assert mean3.shape == (batch, output_dim)
    assert jnp.allclose(mean3.astype(jnp.float32), mean_ref, atol=1e-1, rtol=1e-1), \
        "mean mismatch (bf16)"

    print("KERNEL_OK")
</pallas_src>

<mosaic_0001>
module attributes {stable_mosaic.version = 11 : i64} {
  func.func @_gaussian_policy_kernel(%arg0: i32, %arg1: memref<8x16xf32, #tpu.memory_space<vmem>>, %arg2: memref<16x128xf32, #tpu.memory_space<vmem>>, %arg3: memref<128x128xf32, #tpu.memory_space<vmem>>, %arg4: memref<128x128xf32, #tpu.memory_space<vmem>>, %arg5: memref<1x384xf32, #tpu.memory_space<vmem>>, %arg6: memref<8x128xf32, #tpu.memory_space<vmem>>) attributes {dimension_semantics = [#tpu.dimension_semantics<parallel>], iteration_bounds = array<i64: 3>, scalar_prefetch = 0 : i64, scratch_operands = 0 : i64, tpu.core_type = #tpu.core_type<tc>, window_params = [{transform_indices = @transform_0, window_bounds = array<i64: 8, 16>}, {pipeline_mode = #tpu.pipeline_mode<synchronous>, transform_indices = @transform_1, window_bounds = array<i64: 16, 128>}, {pipeline_mode = #tpu.pipeline_mode<synchronous>, transform_indices = @transform_2, window_bounds = array<i64: 128, 128>}, {pipeline_mode = #tpu.pipeline_mode<synchronous>, transform_indices = @transform_3, window_bounds = array<i64: 128, 128>}, {pipeline_mode = #tpu.pipeline_mode<synchronous>, transform_indices = @transform_4, window_bounds = array<i64: 1, 384>}, {transform_indices = @transform_5, window_bounds = array<i64: 8, 128>}]} {
    %c0 = arith.constant 0 : index
    %c0_0 = arith.constant 0 : index
    %0 = vector.load %arg1[%c0, %c0_0] : memref<8x16xf32, #tpu.memory_space<vmem>>, vector<8x16xf32>
    %c0_1 = arith.constant 0 : index
    %c0_2 = arith.constant 0 : index
    %1 = vector.load %arg2[%c0_1, %c0_2] : memref<16x128xf32, #tpu.memory_space<vmem>>, vector<16x128xf32>
    %c0_3 = arith.constant 0 : index
    %c0_4 = arith.constant 0 : index
    %2 = vector.load %arg5[%c0_3, %c0_4] : memref<1x384xf32, #tpu.memory_space<vmem>>, vector<1x128xf32>
    %cst = arith.constant dense<0.000000e+00> : vector<8x128xf32>
    %3 = tpu.matmul %0, %1, %cst {dimension_numbers = #tpu.dot_dimension_numbers<[1], [0], [0], [1], [0, 0, 1, 1], [], []>} : vector<8x16xf32>, vector<16x128xf32>, vector<8x128xf32> -> vector<8x128xf32>
    %4 = vector.broadcast %2 : vector<1x128xf32> to vector<8x128xf32>
    %5 = arith.addf %3, %4 : vector<8x128xf32>
    %6 = math.tanh %5 : vector<8x128xf32>
    %c0_5 = arith.constant 0 : index
    %c0_6 = arith.constant 0 : index
    %7 = vector.load %arg3[%c0_5, %c0_6] : memref<128x128xf32, #tpu.memory_space<vmem>>, vector<128x128xf32>
    %c0_7 = arith.constant 0 : index
    %c128 = arith.constant 128 : index
    %8 = vector.load %arg5[%c0_7, %c128] : memref<1x384xf32, #tpu.memory_space<vmem>>, vector<1x128xf32>
    %cst_8 = arith.constant dense<0.000000e+00> : vector<8x128xf32>
    %9 = tpu.matmul %6, %7, %cst_8 {dimension_numbers = #tpu.dot_dimension_numbers<[1], [0], [0], [1], [0, 0, 1, 1], [], []>} : vector<8x128xf32>, vector<128x128xf32>, vector<8x128xf32> -> vector<8x128xf32>
    %10 = vector.broadcast %8 : vector<1x128xf32> to vector<8x128xf32>
    %11 = arith.addf %9, %10 : vector<8x128xf32>
    %12 = math.tanh %11 : vector<8x128xf32>
    %c0_9 = arith.constant 0 : index
    %c256 = arith.constant 256 : index
    %13 = vector.load %arg5[%c0_9, %c256] : memref<1x384xf32, #tpu.memory_space<vmem>>, vector<1x128xf32>
    %c0_10 = arith.constant 0 : index
    %c0_11 = arith.constant 0 : index
    %14 = vector.load %arg4[%c0_10, %c0_11] : memref<128x128xf32, #tpu.memory_space<vmem>>, vector<128x128xf32>
    %cst_12 = arith.constant dense<0.000000e+00> : vector<8x128xf32>
    %15 = tpu.matmul %12, %14, %cst_12 {dimension_numbers = #tpu.dot_dimension_numbers<[1], [0], [0], [1], [0, 0, 1, 1], [], []>} : vector<8x128xf32>, vector<128x128xf32>, vector<8x128xf32> -> vector<8x128xf32>
    %16 = vector.broadcast %13 : vector<1x128xf32> to vector<8x128xf32>
    %17 = arith.addf %15, %16 : vector<8x128xf32>
    %c0_13 = arith.constant 0 : index
    %c0_14 = arith.constant 0 : index
    %18 = vector.load %arg6[%c0_13, %c0_14] : memref<8x128xf32, #tpu.memory_space<vmem>>, vector<8x128xf32>
    tpu.vector_store %arg6[%c0_13, %c0_14], %17 {strides = array<i32>} : memref<8x128xf32, #tpu.memory_space<vmem>>, vector<8x128xf32>,
    return
  }
  func.func @transform_0(%arg0: i32) -> (i32, i32) {
    %c0_i32 = arith.constant 0 : i32
    %c0_i32_0 = arith.constant 0 : i32
    return %arg0, %c0_i32 : i32, i32
  }
  func.func @transform_1(%arg0: i32) -> (i32, i32) {
    %c0_i32 = arith.constant 0 : i32
    %c0_i32_0 = arith.constant 0 : i32
    %c0_i32_1 = arith.constant 0 : i32
    return %c0_i32, %c0_i32_0 : i32, i32
  }
  func.func @transform_2(%arg0: i32) -> (i32, i32) {
    %c0_i32 = arith.constant 0 : i32
    %c0_i32_0 = arith.constant 0 : i32
    %c0_i32_1 = arith.constant 0 : i32
    return %c0_i32, %c0_i32_0 : i32, i32
  }
  func.func @transform_3(%arg0: i32) -> (i32, i32) {
    %c0_i32 = arith.constant 0 : i32
    %c0_i32_0 = arith.constant 0 : i32
    %c0_i32_1 = arith.constant 0 : i32
    return %c0_i32, %c0_i32_0 : i32, i32
  }
  func.func @transform_4(%arg0: i32) -> (i32, i32) {
    %c0_i32 = arith.constant 0 : i32
    %c0_i32_0 = arith.constant 0 : i32
    %c0_i32_1 = arith.constant 0 : i32
    return %c0_i32, %c0_i32_0 : i32, i32
  }
  func.func @transform_5(%arg0: i32) -> (i32, i32) {
    %c0_i32 = arith.constant 0 : i32
    %c0_i32_0 = arith.constant 0 : i32
    return %arg0, %c0_i32 : i32, i32
  }
}

</mosaic_0001>

<llo_original>
// kernel: tpu_custom_call.1
$region0: #{tpu_custom_call.1}
  #allocation0 [shape = 'u32[]', space=smem, size = 0x4, offset = 0x4, fixed_abs, tag = 'smem constant byte address 0x4 - core index']
  #allocation1 [shape = 'u32[72,128]{1,0:T(1,128)}', space=vmem, size = 0x9000, scoped, tag = 'internal scratch']
  %s0 = inlined_call_operand.vmem [shape: f32[24,16], index: 0, kind: input, shape index: {}]
  %s1 = inlined_call_operand.vmem [shape: f32[16,128], index: 1, kind: input, shape index: {}]
  %s2 = inlined_call_operand.hbm [shape: f32[128,128], index: 2, kind: input, shape index: {}]
  %s3 = inlined_call_operand.hbm [shape: f32[128,128], index: 3, kind: input, shape index: {}]
  %s4 = inlined_call_operand.vmem [shape: f32[1,384], index: 4, kind: input, shape index: {}]
  %s5 = inlined_call_operand.hbm [shape: f32[24,128], index: 5, kind: output, shape index: {}]
  %s6 = sld [smem:[#allocation0]]
  $region61: #{tpu_custom_call.1} parent=0
    _
  %s8 = ssub.s32 1, %s6
  %s9 = scalar_select 0, %s8, %s6
  $region1: #{tpu_custom_call.1} parent=0
    #allocation2 [shape = 'u8[65536]{0}', space=vmem, size = 0x10000, scoped, tag = 'input window, operand 2, single buffered']
    #allocation3 [shape = 's32[2]{0}', space=sflag, size = 0x8, scoped, tag = 'scoped memory for tpu_custom_call.1']
    #allocation4 [shape = 's32[2]{0}', space=sflag, size = 0x8, scoped, tag = 'scoped memory for tpu_custom_call.1']
    #allocation5 [shape = 'u8[65536]{0}', space=vmem, size = 0x10000, scoped, tag = 'input window, operand 3, single buffered']
    #allocation6 [shape = 's32[1]{0}', space=sflag, size = 0x4, scoped, tag = 'scoped memory for tpu_custom_call.1']
    #allocation7 [shape = 'u8[8192]{0}', space=vmem, size = 0x2000, scoped, tag = 'output window, operand 0']
    %10 = vsyncpa [#allocation3], 0
    %11 = vsyncpa [#allocation6], 0
    %12 = vsyncpa [#allocation4], 0
    %s13 = scalar_lea.sflag [#allocation4], 1
    %14 = vsyncpa %s13, 0
    loop: start=0, step=1, limit=5
    $region2: #{tpu_custom_call.1} parent=1 // loop_pre_header
      _
    $region3: #{tpu_custom_call.1} parent=1 // loop_header
      %s16 = sphi 0, %s20
      %p17 = scmp.ge.s32.totalorder %s16, 5
      %s26 = sphi 0, %s28
      %s29 = sphi 0, %s26
      %s30 = sphi 0, %s29
      %s46 = sphi 0, %s30
      %s50 = sphi 0, %s50
      %s52 = sphi 0, %s50
      %s53 = sphi 0, %s52
      %s67 = sphi 0, %s53
      %s71 = sphi 0, %s71
      %s73 = sphi 0, %s71
      %s74 = sphi 0, %s73
      %s88 = sphi 0, %s74
      %s92 = sphi 0, %s92
      %s94 = sphi 0, %s92
      %s95 = sphi 0, %s94
      %s109 = sphi 0, %s95
      %s113 = sphi 0, %s113
      %s115 = sphi 0, %s113
      %s116 = sphi 0, %s115
      %s130 = sphi 0, %s116
      %s136 = sphi 0, %s138
      %s139 = sphi 0, %s136
      %s140 = sphi 0, %s139
      %s156 = sphi 0, %s140
    $region4: #{tpu_custom_call.1} parent=1 // loop_header_branch
      %19 = sbr.rel (%p17) target = $region8
    $region5: #{tpu_custom_call.1} parent=1 // loop_body
      %s21 = ssub.s32 %s16, 1
      %s22 = ssub.s32 %s16, 2
      %s23 = sadd.s32 %s16, 1
      %s24 = ssub.s32 %s16, %s23
      %p25 = scmp.eq.s32.totalorder %s24, 0
      %s27 = sadd.s32 %s26, 1
      %s28 = scalar_select %p25, %s26, %s27
      %p31 = pneg %p25
      %p32 = scmp.eq.s32.totalorder %s16, 2
      %p33 = por %p31, %p32
      %p34 = scmp.ne.s32.totalorder %s26, %s29
      %p35 = scmp.eq.s32.totalorder %s16, 0
      %p36 = por %p34, %p35
      %p37 = scmp.ne.s32.totalorder %s26, %s29
      %p38 = scmp.eq.s32.totalorder %s21, 2
      %p39 = por %p37, %p38
      %p40 = scmp.ne.s32.totalorder %s29, %s30
      %p41 = scmp.eq.s32.totalorder %s21, 0
      %p42 = por %p40, %p41
      %p43 = scmp.ne.s32.totalorder %s29, %s30
      %p44 = scmp.eq.s32.totalorder %s22, 2
      %p45 = por %p43, %p44
      %p47 = scmp.ne.s32.totalorder %s30, %s46
      %p48 = scmp.eq.s32.totalorder %s22, 0
      %p49 = por %p47, %p48
      %s51 = sadd.s32 %s50, 1
      %p54 = scmp.eq.s32.totalorder %s16, 2
      %p55 = scmp.ne.s32.totalorder %s50, %s52
      %p56 = scmp.eq.s32.totalorder %s16, 0
      %p57 = por %p55, %p56
      %p58 = scmp.ne.s32.totalorder %s50, %s52
      %p59 = scmp.eq.s32.totalorder %s21, 2
      %p60 = por %p58, %p59
      %p61 = scmp.ne.s32.totalorder %s52, %s53
      %p62 = scmp.eq.s32.totalorder %s21, 0
      %p63 = por %p61, %p62
      %p64 = scmp.ne.s32.totalorder %s52, %s53
      %p65 = scmp.eq.s32.totalorder %s22, 2
      %p66 = por %p64, %p65
      %p68 = scmp.ne.s32.totalorder %s53, %s67
      %p69 = scmp.eq.s32.totalorder %s22, 0
      %p70 = por %p68, %p69
      %s72 = sadd.s32 %s71, 1
      %p75 = scmp.eq.s32.totalorder %s16, 2
      %p76 = scmp.ne.s32.totalorder %s71, %s73
      %p77 = scmp.eq.s32.totalorder %s16, 0
      %p78 = por %p76, %p77
      %p79 = scmp.ne.s32.totalorder %s71, %s73
      %p80 = scmp.eq.s32.totalorder %s21, 2
      %p81 = por %p79, %p80
      %p82 = scmp.ne.s32.totalorder %s73, %s74
      %p83 = scmp.eq.s32.totalorder %s21, 0
      %p84 = por %p82, %p83
      %p85 = scmp.ne.s32.totalorder %s73, %s74
      %p86 = scmp.eq.s32.totalorder %s22, 2
      %p87 = por %p85, %p86
      %p89 = scmp.ne.s32.totalorder %s74, %s88
      %p90 = scmp.eq.s32.totalorder %s22, 0
      %p91 = por %p89, %p90
      %s93 = sadd.s32 %s92, 1
      %p96 = scmp.eq.s32.totalorder %s16, 2
      %p97 = scmp.ne.s32.totalorder %s92, %s94
      %p98 = scmp.eq.s32.totalorder %s16, 0
      %p99 = por %p97, %p98
      %p100 = scmp.ne.s32.totalorder %s92, %s94
      %p101 = scmp.eq.s32.totalorder %s21, 2
      %p102 = por %p100, %p101
      %p103 = scmp.ne.s32.totalorder %s94, %s95
      %p104 = scmp.eq.s32.totalorder %s21, 0
      %p105 = por %p103, %p104
      %p106 = scmp.ne.s32.totalorder %s94, %s95
      %p107 = scmp.eq.s32.totalorder %s22, 2
      %p108 = por %p106, %p107
      %p110 = scmp.ne.s32.totalorder %s95, %s109
      %p111 = scmp.eq.s32.totalorder %s22, 0
      %p112 = por %p110, %p111
      %s114 = sadd.s32 %s113, 1
      %p117 = scmp.eq.s32.totalorder %s16, 2
      %p118 = scmp.ne.s32.totalorder %s113, %s115
      %p119 = scmp.eq.s32.totalorder %s16, 0
      %p120 = por %p118, %p119
      %p121 = scmp.ne.s32.totalorder %s113, %s115
      %p122 = scmp.eq.s32.totalorder %s21, 2
      %p123 = por %p121, %p122
      %p124 = scmp.ne.s32.totalorder %s115, %s116
      %p125 = scmp.eq.s32.totalorder %s21, 0
      %p126 = por %p124, %p125
      %p127 = scmp.ne.s32.totalorder %s115, %s116
      %p128 = scmp.eq.s32.totalorder %s22, 2
      %p129 = por %p127, %p128
      %p131 = scmp.ne.s32.totalorder %s116, %s130
      %p132 = scmp.eq.s32.totalorder %s22, 0
      %p133 = por %p131, %p132
      %s134 = ssub.s32 %s16, %s23
      %p135 = scmp.eq.s32.totalorder %s134, 0
      %s137 = sadd.s32 %s136, 1
      %s138 = scalar_select %p135, %s136, %s137
      %p141 = pneg %p135
      %p142 = scmp.eq.s32.totalorder %s16, 2
      %p143 = por %p141, %p142
      %p144 = scmp.ne.s32.totalorder %s136, %s139
      %p145 = scmp.eq.s32.totalorder %s16, 0
      %p146 = por %p144, %p145
      %p147 = scmp.ne.s32.totalorder %s136, %s139
      %p148 = scmp.eq.s32.totalorder %s21, 2
      %p149 = por %p147, %p148
      %p150 = scmp.ne.s32.totalorder %s139, %s140
      %p151 = scmp.eq.s32.totalorder %s21, 0
      %p152 = por %p150, %p151
      %p153 = scmp.ne.s32.totalorder %s139, %s140
      %p154 = scmp.eq.s32.totalorder %s22, 2
      %p155 = por %p153, %p154
      %p157 = scmp.ne.s32.totalorder %s140, %s156
      %p158 = scmp.eq.s32.totalorder %s22, 0
      %p159 = por %p157, %p158
      %p160 = scmp.le.s32.totalorder 1, %s16
      %p161 = scmp.lt.s32.totalorder %s16, 4
      %p162 = pnand %p160, %p161
      %p163 = pneg %p162
      // Predicated region
      $region9: #{tpu_custom_call.1} parent=5 // pred_check
        _
      $region10: #{tpu_custom_call.1} parent=5 // pred_check_branch
        %165 = sbr.rel (%p162) target = $region12
      $region11: #{tpu_custom_call.1} parent=5 // pred_region
        %s166 = ssub.s32 %s16, 1
        // Predicated region
        $region13: #{tpu_custom_call.1} parent=11 // pred_check
          %p167 = pneg %p63
        $region14: #{tpu_custom_call.1} parent=11 // pred_check_branch
          %169 = sbr.rel (%p167) target = $region16
        $region15: #{tpu_custom_call.1} parent=11 // pred_region
          _
        $region16: #{tpu_custom_call.1} parent=11 // pred_fallthru
          _
        // Predicated region
        $region17: #{tpu_custom_call.1} parent=11 // pred_check
          %p170 = pneg %p84
        $region18: #{tpu_custom_call.1} parent=11 // pred_check_branch
          %172 = sbr.rel (%p170) target = $region20
        $region19: #{tpu_custom_call.1} parent=11 // pred_region
          %174 = vsyncadd [#allocation3], 0
          %s175 = sshll.u32 %s2, 4
          %s176 = int_to_ptr.hbm [resolvable:$true] %s175
          %s177 = sshll.u32 [#allocation2], 4
          %s178 = int_to_ptr.vmem [resolvable:$true] %s177
          %183 = dma.hbm_to_vmem [thread:$0]  %s176, 2048, %s178, [#allocation3], 128, 128, 8
        $region20: #{tpu_custom_call.1} parent=11 // pred_fallthru
          _
        // Predicated region
        $region21: #{tpu_custom_call.1} parent=11 // pred_check
          %p184 = pneg %p105
        $region22: #{tpu_custom_call.1} parent=11 // pred_check_branch
          %186 = sbr.rel (%p184) target = $region24
        $region23: #{tpu_custom_call.1} parent=11 // pred_region
          %188 = vsyncadd [#allocation6], 0
          %s189 = sshll.u32 %s3, 4
          %s190 = int_to_ptr.hbm [resolvable:$true] %s189
          %s191 = sshll.u32 [#allocation5], 4
          %s192 = int_to_ptr.vmem [resolvable:$true] %s191
          %197 = dma.hbm_to_vmem [thread:$0]  %s190, 2048, %s192, [#allocation6], 128, 128, 8
        $region24: #{tpu_custom_call.1} parent=11 // pred_fallthru
          _
        // Predicated region
        $region25: #{tpu_custom_call.1} parent=11 // pred_check
          %p198 = pneg %p126
        $region26: #{tpu_custom_call.1} parent=11 // pred_check_branch
          %200 = sbr.rel (%p198) target = $region28
        $region27: #{tpu_custom_call.1} parent=11 // pred_region
          _
        $region28: #{tpu_custom_call.1} parent=11 // pred_fallthru
          _
      $region12: #{tpu_custom_call.1} parent=5 // pred_fallthru
        _
      %p201 = scmp.lt.s32.totalorder %s16, 3
      // Predicated region
      $region29: #{tpu_custom_call.1} parent=5 // pred_check
        %p202 = pneg %p201
      $region30: #{tpu_custom_call.1} parent=5 // pred_check_branch
        %204 = sbr.rel (%p202) target = $region32
      $region31: #{tpu_custom_call.1} parent=5 // pred_region
        // Predicated region
        $region33: #{tpu_custom_call.1} parent=31 // pred_check
          %p205 = pneg %p36
        $region34: #{tpu_custom_call.1} parent=31 // pred_check_branch
          %207 = sbr.rel (%p205) target = $region36
        $region35: #{tpu_custom_call.1} parent=31 // pred_region
          %p208 = scmp.lt.s32.totalorder %s16, 2
          %s209 = scalar_select %p208, %s16, 2
          %s210 = smul.addr %s209, 8
          %s211 = scalar_lea.vmem %s0, %s210
        $region36: #{tpu_custom_call.1} parent=31 // pred_fallthru
          _
      $region32: #{tpu_custom_call.1} parent=5 // pred_fallthru
        _
      %p212 = scmp.le.s32.totalorder 1, %s16
      %p213 = scmp.lt.s32.totalorder %s16, 4
      %p214 = pnand %p212, %p213
      %p215 = pneg %p214
      // Predicated region
      $region37: #{tpu_custom_call.1} parent=5 // pred_check
        _
      $region38: #{tpu_custom_call.1} parent=5 // pred_check_branch
        %217 = sbr.rel (%p214) target = $region40
      $region39: #{tpu_custom_call.1} parent=5 // pred_region
        %s218 = ssub.s32 %s16, 1
        // Predicated region
        $region41: #{tpu_custom_call.1} parent=39 // pred_check
          %p219 = pneg %p84
        $region42: #{tpu_custom_call.1} parent=39 // pred_check_branch
          %221 = sbr.rel (%p219) target = $region44
        $region43: #{tpu_custom_call.1} parent=39 // pred_region
          %223 = dma.done [#allocation3], 2048
        $region44: #{tpu_custom_call.1} parent=39 // pred_fallthru
          _
        // Predicated region
        $region45: #{tpu_custom_call.1} parent=39 // pred_check
          %p224 = pneg %p105
        $region46: #{tpu_custom_call.1} parent=39 // pred_check_branch
          %226 = sbr.rel (%p224) target = $region48
        $region47: #{tpu_custom_call.1} parent=39 // pred_region
          %228 = dma.done [#allocation6], 2048
        $region48: #{tpu_custom_call.1} parent=39 // pred_fallthru
          _
        %p229 = scmp.lt.s32.totalorder %s21, 2
        %s230 = scalar_select %p229, %s21, 2
        %s231 = smul.addr %s230, 8
        %s232 = scalar_lea.vmem %s0, %s231
        %p233 = pneg %p42
        %p234 = pneg %p39
        %p235 = pneg %p63
        %p236 = pneg %p60
        %p237 = pneg %p84
        %p238 = pneg %p81
        %p239 = pneg %p105
        %p240 = pneg %p102
        %p241 = pneg %p126
        %p242 = pneg %p123
        %p243 = pneg %p152
        %p244 = pneg %p149
        %s245 = sand.u32 %s139, 1
        %s246 = scalar_lea.sflag [#allocation4], %s245
        %s247 = sand.u32 %s139, 1
        %s248 = smul.addr %s247, 8
        %s249 = scalar_lea.vmem [#allocation7], %s248
        %p250 = scmp.lt.s32.totalorder %s21, 2
        %s251 = scalar_select %p250, %s21, 2
        %s252 = smul.addr %s251, 8
        %s253 = scalar_lea.vmem %s0, %s252
        %v254 = vld [vmem:[%s253] sm:$0xff]
        %v255 = vld [vmem:[%s1] sm:$0xff]
        %v256 = vld [vmem:[%s1 + $0x8] sm:$0xff]
        %v257 = vld [vmem:[%s4] sm:$0x1]
        %v259 = vperm.slane %v257, 0
        %vm261 = vcmask 130048
        %v263 = vsel %vm261, %v254, 0
        %265 = vmatpush.msra.mxu0 0.0
        %266 = vmatpush.msra.mxu0 0.0
        %267 = vmatpush.msra.mxu0 0.0
        %268 = vmatpush.msra.mxu0 0.0
        %269 = vmatpush.msra.mxu0 0.0
        %270 = vmatpush.msra.mxu0 0.0
        %271 = vmatpush.msra.mxu0 0.0
        %272 = vmatpush.msra.mxu0 0.0
        %273 = vmatpush.msra.mxu0 0.0
        %274 = vmatpush.msra.mxu0 0.0
        %275 = vmatpush.msra.mxu0 0.0
        %276 = vmatpush.msra.mxu0 0.0
        %277 = vmatpush.msra.mxu0 0.0
        %278 = vmatpush.msra.mxu0 0.0
        %279 = vmatpush.msra.mxu0 %v256
        %280 = vmatpush.msra.mxu0 %v255
        %281 = vmatmul.f32.gmra.mxu0 %v263
        %v282 = vpop.f32.mrf.mxu0
        %v283 = vadd.f32 %v259, %v282
        %284 = vdwg.mxu0
        %v285 = vtanh.pop %v283
        %v286 = vld [vmem:[#allocation2] sm:$0xff]
        %v287 = vld [vmem:[#allocation2 + $0x8] sm:$0xff]
        %v288 = vld [vmem:[#allocation2 + $0x10] sm:$0xff]
        %v289 = vld [vmem:[#allocation2 + $0x18] sm:$0xff]
        %v290 = vld [vmem:[#allocation2 + $0x20] sm:$0xff]
        %v291 = vld [vmem:[#allocation2 + $0x28] sm:$0xff]
        %v292 = vld [vmem:[#allocation2 + $0x30] sm:$0xff]
        %v293 = vld [vmem:[#allocation2 + $0x38] sm:$0xff]
        %v294 = vld [vmem:[#allocation2 + $0x40] sm:$0xff]
        %v295 = vld [vmem:[#allocation2 + $0x48] sm:$0xff]
        %v296 = vld [vmem:[#allocation2 + $0x50] sm:$0xff]
        %v297 = vld [vmem:[#allocation2 + $0x58] sm:$0xff]
        %v298 = vld [vmem:[#allocation2 + $0x60] sm:$0xff]
        %v299 = vld [vmem:[#allocation2 + $0x68] sm:$0xff]
        %v300 = vld [vmem:[#allocation2 + $0x70] sm:$0xff]
        %v301 = vld [vmem:[#allocation2 + $0x78] sm:$0xff]
        %v302 = vld [vmem:[%s4 + $0x1] sm:$0x1]
        %v304 = vperm.slane %v302, 0
        %306 = vmatpush.msra.mxu0 %v301
        %307 = vmatpush.msra.mxu0 %v300
        %308 = vmatpush.msra.mxu0 %v299
        %309 = vmatpush.msra.mxu0 %v298
        %310 = vmatpush.msra.mxu0 %v297
        %311 = vmatpush.msra.mxu0 %v296
        %312 = vmatpush.msra.mxu0 %v295
        %313 = vmatpush.msra.mxu0 %v294
        %314 = vmatpush.msra.mxu0 %v293
        %315 = vmatpush.msra.mxu0 %v292
        %316 = vmatpush.msra.mxu0 %v291
        %317 = vmatpush.msra.mxu0 %v290
        %318 = vmatpush.msra.mxu0 %v289
        %319 = vmatpush.msra.mxu0 %v288
        %320 = vmatpush.msra.mxu0 %v287
        %321 = vmatpush.msra.mxu0 %v286
        %322 = vmatmul.f32.gmra.mxu0 %v285
        %v323 = vpop.f32.mrf.mxu0
        %v324 = vadd.f32 %v304, %v323
        %325 = vdwg.mxu0
        %v326 = vtanh.pop %v324
        %v327 = vld [vmem:[%s4 + $0x2] sm:$0x1]
        %v328 = vld [vmem:[#allocation5] sm:$0xff]
        %v329 = vld [vmem:[#allocation5 + $0x8] sm:$0xff]
        %v330 = vld [vmem:[#allocation5 + $0x10] sm:$0xff]
        %v331 = vld [vmem:[#allocation5 + $0x18] sm:$0xff]
        %v332 = vld [vmem:[#allocation5 + $0x20] sm:$0xff]
        %v333 = vld [vmem:[#allocation5 + $0x28] sm:$0xff]
        %v334 = vld [vmem:[#allocation5 + $0x30] sm:$0xff]
        %v335 = vld [vmem:[#allocation5 + $0x38] sm:$0xff]
        %v336 = vld [vmem:[#allocation5 + $0x40] sm:$0xff]
        %v337 = vld [vmem:[#allocation5 + $0x48] sm:$0xff]
        %v338 = vld [vmem:[#allocation5 + $0x50] sm:$0xff]
        %v339 = vld [vmem:[#allocation5 + $0x58] sm:$0xff]
        %v340 = vld [vmem:[#allocation5 + $0x60] sm:$0xff]
        %v341 = vld [vmem:[#allocation5 + $0x68] sm:$0xff]
        %v342 = vld [vmem:[#allocation5 + $0x70] sm:$0xff]
        %v343 = vld [vmem:[#allocation5 + $0x78] sm:$0xff]
        %v345 = vperm.slane %v327, 0
        %347 = vmatpush.msra.mxu0 %v343
        %348 = vmatpush.msra.mxu0 %v342
        %349 = vmatpush.msra.mxu0 %v341
        %350 = vmatpush.msra.mxu0 %v340
        %351 = vmatpush.msra.mxu0 %v339
        %352 = vmatpush.msra.mxu0 %v338
        %353 = vmatpush.msra.mxu0 %v337
        %354 = vmatpush.msra.mxu0 %v336
        %355 = vmatpush.msra.mxu0 %v335
        %356 = vmatpush.msra.mxu0 %v334
        %357 = vmatpush.msra.mxu0 %v333
        %358 = vmatpush.msra.mxu0 %v332
        %359 = vmatpush.msra.mxu0 %v331
        %360 = vmatpush.msra.mxu0 %v330
        %361 = vmatpush.msra.mxu0 %v329
        %362 = vmatpush.msra.mxu0 %v328
        %363 = vmatmul.f32.gmra.mxu0 %v326
        %v364 = vpop.f32.mrf.mxu0
        %v365 = vadd.f32 %v345, %v364
        %366 = vdwg.mxu0
        %367 = vst [vmem:[%s249] sm:$0xff] %v365
        %s368 = sand.u32 %s139, 1
        %s369 = scalar_lea.sflag [#allocation4], %s368
        %s370 = sand.u32 %s139, 1
        %s371 = smul.addr %s370, 8
        %s372 = scalar_lea.vmem [#allocation7], %s371
        // Predicated region
        $region49: #{tpu_custom_call.1} parent=39 // pred_check
          %p373 = pneg %p149
        $region50: #{tpu_custom_call.1} parent=39 // pred_check_branch
          %375 = sbr.rel (%p373) target = $region52
        $region51: #{tpu_custom_call.1} parent=39 // pred_region
          %377 = vsyncadd %s369, 0
          %s378 = smul.addr %s21, 8
          %s379 = scalar_lea.hbm %s5, %s378
          %s381 = sshll.u32 %s372, 4
          %s382 = int_to_ptr.vmem [resolvable:$true] %s381
          %s383 = sshll.u32 %s379, 4
          %s384 = int_to_ptr.hbm [resolvable:$true] %s383
          %386 = dma.vmem_to_hbm [thread:$0]  %s382, 128, %s384, %s369
        $region52: #{tpu_custom_call.1} parent=39 // pred_fallthru
          _
      $region40: #{tpu_custom_call.1} parent=5 // pred_fallthru
        _
      %p387 = scmp.le.s32.totalorder 2, %s16
      // Predicated region
      $region53: #{tpu_custom_call.1} parent=5 // pred_check
        %p388 = pneg %p387
      $region54: #{tpu_custom_call.1} parent=5 // pred_check_branch
        %390 = sbr.rel (%p388) target = $region56
      $region55: #{tpu_custom_call.1} parent=5 // pred_region
        %s391 = ssub.s32 %s16, 2
        // Predicated region
        $region57: #{tpu_custom_call.1} parent=55 // pred_check
          %p392 = pneg %p155
        $region58: #{tpu_custom_call.1} parent=55 // pred_check_branch
          %394 = sbr.rel (%p392) target = $region60
        $region59: #{tpu_custom_call.1} parent=55 // pred_region
          %s395 = sand.u32 %s140, 1
          %s396 = scalar_lea.sflag [#allocation4], %s395
          %s397 = sand.u32 %s140, 1
          %s398 = smul.addr %s397, 8
          %s399 = scalar_lea.vmem [#allocation7], %s398
          %401 = dma.done %s396, 128
        $region60: #{tpu_custom_call.1} parent=55 // pred_fallthru
          _
      $region56: #{tpu_custom_call.1} parent=5 // pred_fallthru
        _
    $region6: #{tpu_custom_call.1} parent=1 // loop_footer
      %s20 = sadd.s32 1, %s16
    $region7: #{tpu_custom_call.1} parent=1 // loop_footer_branch
      %15 = sbr.rel target = $region3
    $region8: #{tpu_custom_call.1} parent=1 // loop_exit
      _
    %402 = vsyncpa [#allocation3], 1
    %s403 = scalar_lea.sflag [#allocation3], 1
    %404 = vsyncpa %s403, 1
    %405 = vsyncpa [#allocation6], 1
    %406 = vsyncpa [#allocation4], 1
    %s407 = scalar_lea.sflag [#allocation4], 1
    %408 = vsyncpa %s407, 1

</llo_original>
